<compile_context>
chip_gen: v6e
topology: v6e:2x2x1
jax: 0.10.0
libtpu: 0.0.40
codegen_flags: <defaults>
</compile_context>

<pallas_src>
import functools
import math

import jax
import jax.numpy as jnp
from jax.experimental import pallas as pl
from jax.experimental.pallas import tpu as pltpu


# ---------------------------------------------------------------------------
# Compiler params / VMEM policy
# ---------------------------------------------------------------------------
@functools.lru_cache(maxsize=None)
def _vmem_limit_bytes():
    # 3/4 of physical VMEM leaves headroom for Mosaic internal scratch and the
    # double-buffered streaming windows.  Safe fallback = 48 MiB (fits v7x).
    try:
        cap = pltpu.get_tpu_info().vmem_capacity_bytes
        return int(cap * 3 // 4)
    except Exception:  # noqa: BLE001 - conservative fallback on any query issue
        return 48 * 1024 * 1024


def _compiler_params():
    return pltpu.CompilerParams(
        dimension_semantics=("parallel",),
        vmem_limit_bytes=_vmem_limit_bytes(),
    )


# ---------------------------------------------------------------------------
# In-kernel helpers
# ---------------------------------------------------------------------------
def _layernorm_f32(x, g, b, eps=1e-5):
    """LayerNorm with statistics in float32 (x must already be f32)."""
    mu = jnp.mean(x, axis=-1, keepdims=True)
    var = jnp.mean((x - mu) ** 2, axis=-1, keepdims=True)
    return (x - mu) * jax.lax.rsqrt(var + eps) * g + b


# ---------------------------------------------------------------------------
# Pallas kernels
# ---------------------------------------------------------------------------
def patch_embed_kernel(p_ref, w_ref, posb_ref, o_ref):
    # p_ref: (1, N, Ppad) bf16; w_ref: (Ppad, D) bf16; posb_ref: (N, D) f32
    # (posb already contains pos-embedding + conv bias).
    emb = jnp.dot(p_ref[0], w_ref[...], preferred_element_type=jnp.float32)
    o_ref[0] = (emb + posb_ref[...]).astype(o_ref.dtype)


def block_kernel(*refs, num_heads, final_ln):
    # Fused transformer block over one full batch element:
    #   LN1 -> QKV (scale pre-folded) -> attention -> Wo -> +res
    #   -> LN2 -> MLP -> +res  [-> final LN]
    if final_ln:
        (x_ref, g1_ref, b1_ref, wqkv_ref, bqkv_ref, wo_ref, bo_ref,
         g2_ref, b2_ref, w1_ref, bm1_ref, w2_ref, bm2_ref,
         lng_ref, lnb_ref, y_ref, yn_ref) = refs
    else:
        (x_ref, g1_ref, b1_ref, wqkv_ref, bqkv_ref, wo_ref, bo_ref,
         g2_ref, b2_ref, w1_ref, bm1_ref, w2_ref, bm2_ref, y_ref) = refs

    n = x_ref.shape[1]
    d = x_ref.shape[2]
    dh = d // num_heads                      # 128 -> lane-aligned heads

    x = x_ref[0].astype(jnp.float32)                                   # (N, D) residual
    h1 = _layernorm_f32(x, g1_ref[...], b1_ref[...]).astype(jnp.bfloat16)

    # Fused QKV projection; 1/sqrt(dh) was folded into wqkv[:, :D] / bqkv[:, :D].
    qkv = jnp.dot(h1, wqkv_ref[...], preferred_element_type=jnp.float32) + bqkv_ref[...]
    q = qkv[:, :d].astype(jnp.bfloat16)
    k = qkv[:, d:2 * d].astype(jnp.bfloat16)
    v = qkv[:, 2 * d:].astype(jnp.bfloat16)

    # Lane-preserving head split (dh = 128) + batched einsums over heads.
    qh = q.reshape(n, num_heads, dh)
    kh = k.reshape(n, num_heads, dh)
    vh = v.reshape(n, num_heads, dh)

    scores = jnp.einsum("qhd,khd->hqk", qh, kh,
                        preferred_element_type=jnp.float32)            # (H, N, N) f32
    scores = scores - jnp.max(scores, axis=-1, keepdims=True)
    p = jnp.exp(scores)
    inv = 1.0 / jnp.sum(p, axis=-1, keepdims=True)                     # exact, per-row
    probs = (p * inv).astype(jnp.bfloat16)

    ctx = jnp.einsum("hqk,khd->qhd", probs, vh,
                     preferred_element_type=jnp.float32)               # (N, H, dh)
    ctx = ctx.astype(jnp.bfloat16).reshape(n, d)                       # merge heads

    attn = jnp.dot(ctx, wo_ref[...], preferred_element_type=jnp.float32) + bo_ref[...]
    x = x + attn                                                       # f32 residual

    h2 = _layernorm_f32(x, g2_ref[...], b2_ref[...]).astype(jnp.bfloat16)
    m = jnp.dot(h2, w1_ref[...], preferred_element_type=jnp.float32) + bm1_ref[...]
    # TODO(synk): torch.nn.GELU uses exact erf; tanh approximation used here.
    m = jax.nn.gelu(m, approximate=True).astype(jnp.bfloat16)
    m = jnp.dot(m, w2_ref[...], preferred_element_type=jnp.float32) + bm2_ref[...]
    y = x + m

    y_ref[0] = y.astype(y_ref.dtype)
    if final_ln:
        yn_ref[0] = _layernorm_f32(y, lng_ref[...], lnb_ref[...]).astype(yn_ref.dtype)


# ---------------------------------------------------------------------------
# Wrappers (pallas_call plumbing)
# ---------------------------------------------------------------------------
def patch_embed(patches, w_emb, pos_bias):
    B, N, P = patches.shape
    D = w_emb.shape[1]
    return pl.pallas_call(
        patch_embed_kernel,
        out_shape=jax.ShapeDtypeStruct((B, N, D), jnp.bfloat16),
        grid=(B,),
        in_specs=[
            pl.BlockSpec((1, N, P), lambda b: (b, 0, 0)),
            pl.BlockSpec((P, D), lambda b: (0, 0)),
            pl.BlockSpec((N, D), lambda b: (0, 0)),
        ],
        out_specs=pl.BlockSpec((1, N, D), lambda b: (b, 0, 0)),
        compiler_params=_compiler_params(),
    )(patches, w_emb, pos_bias)


def transformer_block(x, blk, *, num_heads, final_ln_params=None):
    B, N, D = x.shape
    M = blk["w1"].shape[1]
    final_ln = final_ln_params is not None
    kern = functools.partial(block_kernel, num_heads=num_heads, final_ln=final_ln)

    def rep(shape):                      # weight / bias block: constant across grid
        return pl.BlockSpec(shape, lambda b: (0, 0))

    tok = pl.BlockSpec((1, N, D), lambda b: (b, 0, 0))   # per-batch-element block

    in_specs = [
        tok,                                               # x residual
        rep((1, D)), rep((1, D)),                          # LN1 gamma/beta
        rep((D, 3 * D)), rep((1, 3 * D)),                  # fused QKV weight / bias
        rep((D, D)), rep((1, D)),                          # Wo, bo
        rep((1, D)), rep((1, D)),                          # LN2 gamma/beta
        rep((D, M)), rep((1, M)),                          # MLP W1, b1
        rep((M, D)), rep((1, D)),                          # MLP W2, b2
    ]
    args = [x, blk["g1"], blk["b1"], blk["wqkv"], blk["bqkv"],
            blk["wo"], blk["bo"], blk["g2"], blk["b2"],
            blk["w1"], blk["bm1"], blk["w2"], blk["bm2"]]

    if final_ln:
        in_specs += [rep((1, D)), rep((1, D))]             # final LN gamma/beta
        args += list(final_ln_params)
        out_shape = (jax.ShapeDtypeStruct((B, N, D), jnp.bfloat16),
                     jax.ShapeDtypeStruct((B, N, D), jnp.bfloat16))
        out_specs = (tok, tok)
    else:
        out_shape = jax.ShapeDtypeStruct((B, N, D), jnp.bfloat16)
        out_specs = tok

    return pl.pallas_call(
        kern,
        out_shape=out_shape,
        grid=(B,),
        in_specs=in_specs,
        out_specs=out_specs,
        compiler_params=_compiler_params(),
    )(*args)


# ---------------------------------------------------------------------------
# Glue: patchify + parameter init / prep + forward
# ---------------------------------------------------------------------------
def patchify(x, p, pad_to=None):
    # x: [B, F, C, H, W]  ->  patches: [B, F*(H/p)*(W/p), C*p*p]  (zero-padded K dim)
    B, F, C, H, W = x.shape
    gh, gw = H // p, W // p
    x = x.reshape(B, F, C, gh, p, gw, p)
    x = x.transpose(0, 1, 3, 5, 2, 4, 6)          # B, F, gh, gw, C, p, p
    patches = x.reshape(B, F * gh * gw, C * p * p)
    if pad_to is not None and patches.shape[-1] < pad_to:
        patches = jnp.pad(patches, ((0, 0), (0, 0), (0, pad_to - patches.shape[-1])))
    return patches


def init_params(key, *, patch_dim, n_patches, hidden, mlp_dim, num_layers):
    def dense(k, shape):
        # weights kept in bf16 (MXU-native); LN params / biases stay f32.
        return (jax.random.normal(k, shape, jnp.float32) * 0.02).astype(jnp.bfloat16)

    keys = iter(jax.random.split(key, 2 + num_layers * 4))
    params = {
        "w_emb": dense(next(keys), (patch_dim, hidden)),
        "b_emb": jnp.zeros((1, hidden), jnp.float32),
        "pos": jax.random.normal(next(keys), (n_patches, hidden), jnp.float32) * 0.02,
        "ln_g": jnp.ones((1, hidden), jnp.float32),
        "ln_b": jnp.zeros((1, hidden), jnp.float32),
        "blocks": [],
    }
    for _ in range(num_layers):
        blk = {
            "g1": jnp.ones((1, hidden), jnp.float32),
            "b1": jnp.zeros((1, hidden), jnp.float32),
            "wqkv": dense(next(keys), (hidden, 3 * hidden)),   # fused Q|K|V
            "bqkv": jnp.zeros((1, 3 * hidden), jnp.float32),
            "wo": dense(next(keys), (hidden, hidden)),
            "bo": jnp.zeros((1, hidden), jnp.float32),
            "g2": jnp.ones((1, hidden), jnp.float32),
            "b2": jnp.zeros((1, hidden), jnp.float32),
            "w1": dense(next(keys), (hidden, mlp_dim)),
            "bm1": jnp.zeros((1, mlp_dim), jnp.float32),
            "w2": dense(next(keys), (mlp_dim, hidden)),
            "bm2": jnp.zeros((1, hidden), jnp.float32),
        }
        params["blocks"].append(blk)
    return params


def prepare_params(params, *, num_heads, pad_patch_dim=128):
    """Mathematically-identical re-parameterisation for the kernels:
       * zero-pad the patch-embedding weight's K dim to a lane-dense 128,
       * fold the conv bias into the positional table,
       * fold 1/sqrt(head_dim) into the Q columns of wqkv / bqkv."""
    hidden = params["w_emb"].shape[1]
    scale = 1.0 / math.sqrt(hidden // num_heads)

    prepped = dict(params)
    P = params["w_emb"].shape[0]
    if P < pad_patch_dim:
        w = jnp.zeros((pad_patch_dim, hidden), params["w_emb"].dtype)
        prepped["w_emb"] = w.at[:P].set(params["w_emb"])
    prepped["posb"] = params["pos"] + params["b_emb"]

    blocks = []
    for blk in params["blocks"]:
        blk = dict(blk)
        wq = (blk["wqkv"][:, :hidden].astype(jnp.float32) * scale).astype(blk["wqkv"].dtype)
        blk["wqkv"] = jnp.concatenate([wq, blk["wqkv"][:, hidden:]], axis=1)
        blk["bqkv"] = blk["bqkv"].at[:, :hidden].multiply(scale)
        blocks.append(blk)
    prepped["blocks"] = blocks
    return prepped


def video_vit_forward(x, params, *, patch_size, num_heads, pad_patch_dim=128):
    patches = patchify(x, patch_size, pad_to=pad_patch_dim).astype(jnp.bfloat16)
    h = patch_embed(patches, params["w_emb"], params["posb"])

    hidden_states_out = []
    out_norm = None
    n_blocks = len(params["blocks"])
    for li, blk in enumerate(params["blocks"]):
        if li == n_blocks - 1:
            # final LayerNorm fused into the last block; the pre-norm activation
            # is still emitted for hidden_states_out (matches torch semantics).
            h, out_norm = transformer_block(
                h, blk, num_heads=num_heads,
                final_ln_params=(params["ln_g"], params["ln_b"]))
        else:
            h = transformer_block(h, blk, num_heads=num_heads)
        hidden_states_out.append(h)
    return out_norm, hidden_states_out     # cls_head=False -> (x, hidden_states_out)


# ---------------------------------------------------------------------------
# Main
# ---------------------------------------------------------------------------
if __name__ == "__main__":
    # small config consistent with VideoViT.__init__, with lane-dense feature dims
    B, n_frames, C = 2, 2, 1
    img_size, patch_size = 32, 8
    hidden, mlp_dim = 256, 512              # multiples of 128
    num_heads, num_layers = 2, 2            # head_dim = 128 (lane-aligned)

    grid_sp = img_size // patch_size
    n_patches = n_frames * grid_sp * grid_sp          # 2 * 4 * 4 = 32
    patch_dim = C * patch_size * patch_size           # 64 (padded to 128 for the MXU)

    key = jax.random.PRNGKey(0)
    k_x, k_p = jax.random.split(key)
    x = jax.random.normal(k_x, (B, n_frames, C, img_size, img_size), jnp.float32)

    params = init_params(k_p, patch_dim=patch_dim, n_patches=n_patches,
                         hidden=hidden, mlp_dim=mlp_dim, num_layers=num_layers)
    params = prepare_params(params, num_heads=num_heads, pad_patch_dim=128)

    out, hidden_states = video_vit_forward(
        x, params, patch_size=patch_size, num_heads=num_heads, pad_patch_dim=128)
    jax.block_until_ready((out, hidden_states))

    assert out.shape == (B, n_patches, hidden)
    assert len(hidden_states) == num_layers
    print("KERNEL_OK")
</pallas_src>

<mosaic_0001>
module attributes {stable_mosaic.version = 11 : i64} {
  func.func @patch_embed_kernel(%arg0: i32, %arg1: memref<1x32x128xbf16, #tpu.memory_space<vmem>>, %arg2: memref<128x256xbf16, #tpu.memory_space<vmem>>, %arg3: memref<32x256xf32, #tpu.memory_space<vmem>>, %arg4: memref<1x32x256xbf16, #tpu.memory_space<vmem>>) attributes {dimension_semantics = [#tpu.dimension_semantics<parallel>], iteration_bounds = array<i64: 2>, scalar_prefetch = 0 : i64, scratch_operands = 0 : i64, tpu.core_type = #tpu.core_type<tc>, window_params = [{transform_indices = @transform_0, window_bounds = array<i64: 1, 32, 128>}, {pipeline_mode = #tpu.pipeline_mode<synchronous>, transform_indices = @transform_1, window_bounds = array<i64: 128, 256>}, {pipeline_mode = #tpu.pipeline_mode<synchronous>, transform_indices = @transform_2, window_bounds = array<i64: 32, 256>}, {transform_indices = @transform_3, window_bounds = array<i64: 1, 32, 256>}]} {
    %c0 = arith.constant 0 : index
    %c0_0 = arith.constant 0 : index
    %c0_1 = arith.constant 0 : index
    %0 = vector.load %arg1[%c0, %c0_0, %c0_1] : memref<1x32x128xbf16, #tpu.memory_space<vmem>>, vector<1x32x128xbf16>
    %1 = vector.shape_cast %0 : vector<1x32x128xbf16> to vector<32x128xbf16>
    %c0_2 = arith.constant 0 : index
    %c0_3 = arith.constant 0 : index
    %2 = vector.load %arg2[%c0_2, %c0_3] : memref<128x256xbf16, #tpu.memory_space<vmem>>, vector<128x256xbf16>
    %cst = arith.constant dense<0.000000e+00> : vector<32x256xf32>
    %3 = tpu.matmul %1, %2, %cst {dimension_numbers = #tpu.dot_dimension_numbers<[1], [0], [0], [1], [0, 0, 1, 1], [], []>} : vector<32x128xbf16>, vector<128x256xbf16>, vector<32x256xf32> -> vector<32x256xf32>
    %c0_4 = arith.constant 0 : index
    %c0_5 = arith.constant 0 : index
    %4 = vector.load %arg3[%c0_4, %c0_5] : memref<32x256xf32, #tpu.memory_space<vmem>>, vector<32x256xf32>
    %5 = arith.addf %3, %4 : vector<32x256xf32>
    %6 = arith.truncf %5 : vector<32x256xf32> to vector<32x256xbf16>
    %c0_6 = arith.constant 0 : index
    %c0_7 = arith.constant 0 : index
    %c0_8 = arith.constant 0 : index
    %7 = vector.load %arg4[%c0_6, %c0_7, %c0_8] : memref<1x32x256xbf16, #tpu.memory_space<vmem>>, vector<1x32x256xbf16>
    %8 = vector.shape_cast %7 : vector<1x32x256xbf16> to vector<32x256xbf16>
    %9 = vector.shape_cast %6 : vector<32x256xbf16> to vector<1x32x256xbf16>
    tpu.vector_store %arg4[%c0_6, %c0_7, %c0_8], %9 {strides = array<i32>} : memref<1x32x256xbf16, #tpu.memory_space<vmem>>, vector<1x32x256xbf16>,
    return
  }
  func.func @transform_0(%arg0: i32) -> (i32, i32, i32) {
    %c0_i32 = arith.constant 0 : i32
    %c0_i32_0 = arith.constant 0 : i32
    %c0_i32_1 = arith.constant 0 : i32
    return %arg0, %c0_i32, %c0_i32_0 : i32, i32, i32
  }
  func.func @transform_1(%arg0: i32) -> (i32, i32) {
    %c0_i32 = arith.constant 0 : i32
    %c0_i32_0 = arith.constant 0 : i32
    %c0_i32_1 = arith.constant 0 : i32
    return %c0_i32, %c0_i32_0 : i32, i32
  }
  func.func @transform_2(%arg0: i32) -> (i32, i32) {
    %c0_i32 = arith.constant 0 : i32
    %c0_i32_0 = arith.constant 0 : i32
    %c0_i32_1 = arith.constant 0 : i32
    return %c0_i32, %c0_i32_0 : i32, i32
  }
  func.func @transform_3(%arg0: i32) -> (i32, i32, i32) {
    %c0_i32 = arith.constant 0 : i32
    %c0_i32_0 = arith.constant 0 : i32
    %c0_i32_1 = arith.constant 0 : i32
    return %arg0, %c0_i32, %c0_i32_0 : i32, i32, i32
  }
}

</mosaic_0001>

<llo_original>
// kernel: tpu_custom_call.1
$region0: #{tpu_custom_call.1}
  #allocation0 [shape = 'u32[]', space=smem, size = 0x4, offset = 0x4, fixed_abs, tag = 'smem constant byte address 0x4 - core index']
  #allocation1 [shape = 'u32[144,128]{1,0:T(1,128)}', space=vmem, size = 0x12000, scoped, tag = 'internal scratch']
  %s0 = inlined_call_operand.hbm [shape: bf16[2,32,128], index: 0, kind: input, shape index: {}]
  %s1 = inlined_call_operand.hbm [shape: bf16[128,256], index: 1, kind: input, shape index: {}]
  %s2 = inlined_call_operand.hbm [shape: f32[32,256], index: 2, kind: input, shape index: {}]
  %s3 = inlined_call_operand.hbm [shape: bf16[2,32,256], index: 3, kind: output, shape index: {}]
  %s4 = sld [smem:[#allocation0]]
  $region57: #{tpu_custom_call.1} parent=0
    _
  %s6 = ssub.s32 1, %s4
  %s7 = scalar_select 0, %s6, %s4
  $region1: #{tpu_custom_call.1} parent=0
    #allocation2 [shape = 'u8[16384]{0}', space=vmem, size = 0x4000, scoped, tag = 'input window, operand 0']
    #allocation3 [shape = 's32[2]{0}', space=sflag, size = 0x8, scoped, tag = 'scoped memory for tpu_custom_call.1']
    #allocation4 [shape = 's32[2]{0}', space=sflag, size = 0x8, scoped, tag = 'scoped memory for tpu_custom_call.1']
    #allocation5 [shape = 'u8[65536]{0}', space=vmem, size = 0x10000, scoped, tag = 'input window, operand 1, single buffered']
    #allocation6 [shape = 's32[1]{0}', space=sflag, size = 0x4, scoped, tag = 'scoped memory for tpu_custom_call.1']
    #allocation7 [shape = 'u8[32768]{0}', space=vmem, size = 0x8000, scoped, tag = 'input window, operand 2, single buffered']
    #allocation8 [shape = 'u8[32768]{0}', space=vmem, size = 0x8000, scoped, tag = 'output window, operand 0']
    %8 = vsyncpa [#allocation3], 0
    %s9 = scalar_lea.sflag [#allocation3], 1
    %10 = vsyncpa %s9, 0
    %11 = vsyncpa [#allocation6], 0
    %12 = vsyncpa [#allocation4], 0
    %s13 = scalar_lea.sflag [#allocation4], 1
    %14 = vsyncpa %s13, 0
    loop: start=0, step=1, limit=4
    $region2: #{tpu_custom_call.1} parent=1 // loop_pre_header
      _
    $region3: #{tpu_custom_call.1} parent=1 // loop_header
      %s16 = sphi 0, %s20
      %p17 = scmp.ge.s32.totalorder %s16, 4
      %s26 = sphi 0, %s28
      %s29 = sphi 0, %s26
      %s30 = sphi 0, %s29
      %s46 = sphi 0, %s30
      %s50 = sphi 0, %s50
      %s52 = sphi 0, %s50
      %s53 = sphi 0, %s52
      %s67 = sphi 0, %s53
      %s71 = sphi 0, %s71
      %s73 = sphi 0, %s71
      %s74 = sphi 0, %s73
      %s88 = sphi 0, %s74
      %s94 = sphi 0, %s96
      %s97 = sphi 0, %s94
      %s98 = sphi 0, %s97
      %s114 = sphi 0, %s98
    $region4: #{tpu_custom_call.1} parent=1 // loop_header_branch
      %19 = sbr.rel (%p17) target = $region8
    $region5: #{tpu_custom_call.1} parent=1 // loop_body
      %s21 = ssub.s32 %s16, 1
      %s22 = ssub.s32 %s16, 2
      %s23 = sadd.s32 %s16, 1
      %s24 = ssub.s32 %s16, %s23
      %p25 = scmp.eq.s32.totalorder %s24, 0
      %s27 = sadd.s32 %s26, 1
      %s28 = scalar_select %p25, %s26, %s27
      %p31 = pneg %p25
      %p32 = scmp.eq.s32.totalorder %s16, 1
      %p33 = por %p31, %p32
      %p34 = scmp.ne.s32.totalorder %s26, %s29
      %p35 = scmp.eq.s32.totalorder %s16, 0
      %p36 = por %p34, %p35
      %p37 = scmp.ne.s32.totalorder %s26, %s29
      %p38 = scmp.eq.s32.totalorder %s21, 1
      %p39 = por %p37, %p38
      %p40 = scmp.ne.s32.totalorder %s29, %s30
      %p41 = scmp.eq.s32.totalorder %s21, 0
      %p42 = por %p40, %p41
      %p43 = scmp.ne.s32.totalorder %s29, %s30
      %p44 = scmp.eq.s32.totalorder %s22, 1
      %p45 = por %p43, %p44
      %p47 = scmp.ne.s32.totalorder %s30, %s46
      %p48 = scmp.eq.s32.totalorder %s22, 0
      %p49 = por %p47, %p48
      %s51 = sadd.s32 %s50, 1
      %p54 = scmp.eq.s32.totalorder %s16, 1
      %p55 = scmp.ne.s32.totalorder %s50, %s52
      %p56 = scmp.eq.s32.totalorder %s16, 0
      %p57 = por %p55, %p56
      %p58 = scmp.ne.s32.totalorder %s50, %s52
      %p59 = scmp.eq.s32.totalorder %s21, 1
      %p60 = por %p58, %p59
      %p61 = scmp.ne.s32.totalorder %s52, %s53
      %p62 = scmp.eq.s32.totalorder %s21, 0
      %p63 = por %p61, %p62
      %p64 = scmp.ne.s32.totalorder %s52, %s53
      %p65 = scmp.eq.s32.totalorder %s22, 1
      %p66 = por %p64, %p65
      %p68 = scmp.ne.s32.totalorder %s53, %s67
      %p69 = scmp.eq.s32.totalorder %s22, 0
      %p70 = por %p68, %p69
      %s72 = sadd.s32 %s71, 1
      %p75 = scmp.eq.s32.totalorder %s16, 1
      %p76 = scmp.ne.s32.totalorder %s71, %s73
      %p77 = scmp.eq.s32.totalorder %s16, 0
      %p78 = por %p76, %p77
      %p79 = scmp.ne.s32.totalorder %s71, %s73
      %p80 = scmp.eq.s32.totalorder %s21, 1
      %p81 = por %p79, %p80
      %p82 = scmp.ne.s32.totalorder %s73, %s74
      %p83 = scmp.eq.s32.totalorder %s21, 0
      %p84 = por %p82, %p83
      %p85 = scmp.ne.s32.totalorder %s73, %s74
      %p86 = scmp.eq.s32.totalorder %s22, 1
      %p87 = por %p85, %p86
      %p89 = scmp.ne.s32.totalorder %s74, %s88
      %p90 = scmp.eq.s32.totalorder %s22, 0
      %p91 = por %p89, %p90
      %s92 = ssub.s32 %s16, %s23
      %p93 = scmp.eq.s32.totalorder %s92, 0
      %s95 = sadd.s32 %s94, 1
      %s96 = scalar_select %p93, %s94, %s95
      %p99 = pneg %p93
      %p100 = scmp.eq.s32.totalorder %s16, 1
      %p101 = por %p99, %p100
      %p102 = scmp.ne.s32.totalorder %s94, %s97
      %p103 = scmp.eq.s32.totalorder %s16, 0
      %p104 = por %p102, %p103
      %p105 = scmp.ne.s32.totalorder %s94, %s97
      %p106 = scmp.eq.s32.totalorder %s21, 1
      %p107 = por %p105, %p106
      %p108 = scmp.ne.s32.totalorder %s97, %s98
      %p109 = scmp.eq.s32.totalorder %s21, 0
      %p110 = por %p108, %p109
      %p111 = scmp.ne.s32.totalorder %s97, %s98
      %p112 = scmp.eq.s32.totalorder %s22, 1
      %p113 = por %p111, %p112
      %p115 = scmp.ne.s32.totalorder %s98, %s114
      %p116 = scmp.eq.s32.totalorder %s22, 0
      %p117 = por %p115, %p116
      %p118 = scmp.le.s32.totalorder 1, %s16
      %p119 = scmp.lt.s32.totalorder %s16, 3
      %p120 = pnand %p118, %p119
      %p121 = pneg %p120
      // Predicated region
      $region9: #{tpu_custom_call.1} parent=5 // pred_check
        _
      $region10: #{tpu_custom_call.1} parent=5 // pred_check_branch
        %123 = sbr.rel (%p120) target = $region12
      $region11: #{tpu_custom_call.1} parent=5 // pred_region
        %s124 = ssub.s32 %s16, 1
        // Predicated region
        $region13: #{tpu_custom_call.1} parent=11 // pred_check
          %p125 = pneg %p63
        $region14: #{tpu_custom_call.1} parent=11 // pred_check_branch
          %127 = sbr.rel (%p125) target = $region16
        $region15: #{tpu_custom_call.1} parent=11 // pred_region
          %s129 = ssub.s32 2048, 2048
          %130 = vsyncadd [#allocation6], %s129
          %s131 = sshll.u32 [#allocation5], 4
          %s132 = int_to_ptr.vmem [resolvable:$true] %s131
          %137 = dma.hbm_to_vmem [thread:$0]  %s1, 2048, %s132, [#allocation6], 128, 128, 8
        $region16: #{tpu_custom_call.1} parent=11 // pred_fallthru
          _
        // Predicated region
        $region17: #{tpu_custom_call.1} parent=11 // pred_check
          %p138 = pneg %p84
        $region18: #{tpu_custom_call.1} parent=11 // pred_check_branch
          %140 = sbr.rel (%p138) target = $region20
        $region19: #{tpu_custom_call.1} parent=11 // pred_region
          %s142 = ssub.s32 1024, 1024
          %143 = vsyncadd [#allocation6], %s142
          %s144 = sshll.u32 [#allocation7], 4
          %s145 = int_to_ptr.vmem [resolvable:$true] %s144
          %150 = dma.hbm_to_vmem [thread:$0]  %s2, 1024, %s145, [#allocation6], 256, 256, 16
        $region20: #{tpu_custom_call.1} parent=11 // pred_fallthru
          _
      $region12: #{tpu_custom_call.1} parent=5 // pred_fallthru
        _
      %p151 = scmp.lt.s32.totalorder %s16, 2
      // Predicated region
      $region21: #{tpu_custom_call.1} parent=5 // pred_check
        %p152 = pneg %p151
      $region22: #{tpu_custom_call.1} parent=5 // pred_check_branch
        %154 = sbr.rel (%p152) target = $region24
      $region23: #{tpu_custom_call.1} parent=5 // pred_region
        // Predicated region
        $region25: #{tpu_custom_call.1} parent=23 // pred_check
          %p155 = pneg %p36
        $region26: #{tpu_custom_call.1} parent=23 // pred_check_branch
          %157 = sbr.rel (%p155) target = $region28
        $region27: #{tpu_custom_call.1} parent=23 // pred_region
          %s158 = sand.u32 %s26, 1
          %s159 = scalar_lea.sflag [#allocation3], %s158
          %s160 = sand.u32 %s26, 1
          %s161 = smul.addr %s160, 16
          %s162 = scalar_lea.vmem [#allocation2], %s161
          %s164 = ssub.s32 256, 256
          %165 = vsyncadd %s159, %s164
          %s166 = smul.addr %s16, 4
          %s167 = smul.addr %s166, 64
          %s168 = scalar_lea.hbm %s0, %s167
          %s169 = sshll.u32 %s162, 4
          %s170 = int_to_ptr.vmem [resolvable:$true] %s169
          %175 = dma.hbm_to_vmem [thread:$0]  %s168, 256, %s170, %s159, 64, 64, 4
        $region28: #{tpu_custom_call.1} parent=23 // pred_fallthru
          _
      $region24: #{tpu_custom_call.1} parent=5 // pred_fallthru
        _
      %p176 = scmp.le.s32.totalorder 1, %s16
      %p177 = scmp.lt.s32.totalorder %s16, 3
      %p178 = pnand %p176, %p177
      %p179 = pneg %p178
      // Predicated region
      $region29: #{tpu_custom_call.1} parent=5 // pred_check
        _
      $region30: #{tpu_custom_call.1} parent=5 // pred_check_branch
        %181 = sbr.rel (%p178) target = $region32
      $region31: #{tpu_custom_call.1} parent=5 // pred_region
        %s182 = ssub.s32 %s16, 1
        %s183 = sand.u32 %s29, 1
        %s184 = scalar_lea.sflag [#allocation3], %s183
        %s185 = sand.u32 %s29, 1
        %s186 = smul.addr %s185, 16
        %s187 = scalar_lea.vmem [#allocation2], %s186
        // Predicated region
        $region33: #{tpu_custom_call.1} parent=31 // pred_check
          %p188 = pneg %p42
        $region34: #{tpu_custom_call.1} parent=31 // pred_check_branch
          %190 = sbr.rel (%p188) target = $region36
        $region35: #{tpu_custom_call.1} parent=31 // pred_region
          %191 = dma.done %s184, 256
        $region36: #{tpu_custom_call.1} parent=31 // pred_fallthru
          _
        // Predicated region
        $region37: #{tpu_custom_call.1} parent=31 // pred_check
          %p192 = pneg %p63
        $region38: #{tpu_custom_call.1} parent=31 // pred_check_branch
          %194 = sbr.rel (%p192) target = $region40
        $region39: #{tpu_custom_call.1} parent=31 // pred_region
          %195 = dma.done [#allocation6], 2048
        $region40: #{tpu_custom_call.1} parent=31 // pred_fallthru
          _
        // Predicated region
        $region41: #{tpu_custom_call.1} parent=31 // pred_check
          %p196 = pneg %p84
        $region42: #{tpu_custom_call.1} parent=31 // pred_check_branch
          %198 = sbr.rel (%p196) target = $region44
        $region43: #{tpu_custom_call.1} parent=31 // pred_region
          %199 = dma.done [#allocation6], 1024
        $region44: #{tpu_custom_call.1} parent=31 // pred_fallthru
          _
        %s200 = sand.u32 %s29, 1
        %s201 = scalar_lea.sflag [#allocation3], %s200
        %s202 = sand.u32 %s29, 1
        %s203 = smul.addr %s202, 16
        %s204 = scalar_lea.vmem [#allocation2], %s203
        %p205 = pneg %p42
        %p206 = pneg %p39
        %p207 = pneg %p63
        %p208 = pneg %p60
        %p209 = pneg %p84
        %p210 = pneg %p81
        %p211 = pneg %p110
        %p212 = pneg %p107
        %s213 = sand.u32 %s97, 1
        %s214 = scalar_lea.sflag [#allocation4], %s213
        %s215 = sand.u32 %s97, 1
        %s216 = smul.addr %s215, 32
        %s217 = scalar_lea.vmem [#allocation8], %s216
        %v219 = vld [vmem:[%s187] sm:$0xf]
        %v220 = vld [vmem:[%s187 + $0x4] sm:$0xf]
        %v221 = vld [vmem:[%s187 + $0x8] sm:$0xf]
        %v222 = vld [vmem:[%s187 + $0xc] sm:$0xf]
        %v223 = vld [vmem:[#allocation5] sm:$0xff]
        %v224 = vld [vmem:[#allocation5 + $0x8] sm:$0xff]
        %v225 = vld [vmem:[#allocation5 + $0x10] sm:$0xff]
        %v226 = vld [vmem:[#allocation5 + $0x18] sm:$0xff]
        %v227 = vld [vmem:[#allocation5 + $0x20] sm:$0xff]
        %v228 = vld [vmem:[#allocation5 + $0x28] sm:$0xff]
        %v229 = vld [vmem:[#allocation5 + $0x30] sm:$0xff]
        %v230 = vld [vmem:[#allocation5 + $0x38] sm:$0xff]
        %v231 = vld [vmem:[#allocation5 + $0x40] sm:$0xff]
        %v232 = vld [vmem:[#allocation5 + $0x48] sm:$0xff]
        %v233 = vld [vmem:[#allocation5 + $0x50] sm:$0xff]
        %v234 = vld [vmem:[#allocation5 + $0x58] sm:$0xff]
        %v235 = vld [vmem:[#allocation5 + $0x60] sm:$0xff]
        %v236 = vld [vmem:[#allocation5 + $0x68] sm:$0xff]
        %v237 = vld [vmem:[#allocation5 + $0x70] sm:$0xff]
        %v238 = vld [vmem:[#allocation5 + $0x78] sm:$0xff]
        %v239 = vld [vmem:[#allocation7] sm:$0xff]
        %v240 = vld [vmem:[#allocation7 + $0x8] sm:$0xff]
        %v241 = vld [vmem:[#allocation7 + $0x10] sm:$0xff]
        %v242 = vld [vmem:[#allocation7 + $0x18] sm:$0xff]
        %v243 = vld [vmem:[#allocation7 + $0x20] sm:$0xff]
        %v244 = vld [vmem:[#allocation7 + $0x28] sm:$0xff]
        %v245 = vld [vmem:[#allocation7 + $0x30] sm:$0xff]
        %v246 = vld [vmem:[#allocation7 + $0x38] sm:$0xff]
        %v251 = vunpack.c.l.b16 %v219
        %v252 = vunpack.c.l.b16 %v220
        %v253 = vunpack.c.l.b16 %v221
        %v254 = vunpack.c.l.b16 %v222
        %v255 = vpack.c.b16 %v252, %v251
        %v256 = vpack.c.b16 %v254, %v253
        %v275 = vunpack.c.l.b16 %v223
        %v276 = vunpack.c.h.b16 %v223
        %v277 = vunpack.c.l.b16 %v224
        %v278 = vunpack.c.h.b16 %v224
        %v279 = vunpack.c.l.b16 %v225
        %v280 = vunpack.c.h.b16 %v225
        %v281 = vunpack.c.l.b16 %v226
        %v282 = vunpack.c.h.b16 %v226
        %v283 = vunpack.c.l.b16 %v227
        %v284 = vunpack.c.h.b16 %v227
        %v285 = vunpack.c.l.b16 %v228
        %v286 = vunpack.c.h.b16 %v228
        %v287 = vunpack.c.l.b16 %v229
        %v288 = vunpack.c.h.b16 %v229
        %v289 = vunpack.c.l.b16 %v230
        %v290 = vunpack.c.h.b16 %v230
        %v291 = vunpack.c.l.b16 %v231
        %v292 = vunpack.c.h.b16 %v231
        %v293 = vunpack.c.l.b16 %v232
        %v294 = vunpack.c.h.b16 %v232
        %v295 = vunpack.c.l.b16 %v233
        %v296 = vunpack.c.h.b16 %v233
        %v297 = vunpack.c.l.b16 %v234
        %v298 = vunpack.c.h.b16 %v234
        %v299 = vunpack.c.l.b16 %v235
        %v300 = vunpack.c.h.b16 %v235
        %v301 = vunpack.c.l.b16 %v236
        %v302 = vunpack.c.h.b16 %v236
        %v303 = vunpack.c.l.b16 %v237
        %v304 = vunpack.c.h.b16 %v237
        %v305 = vunpack.c.l.b16 %v238
        %v306 = vunpack.c.h.b16 %v238
        %v307 = vpack.c.b16 %v277, %v275
        %v308 = vpack.c.b16 %v278, %v276
        %v309 = vpack.c.b16 %v281, %v279
        %v310 = vpack.c.b16 %v282, %v280
        %v311 = vpack.c.b16 %v285, %v283
        %v312 = vpack.c.b16 %v286, %v284
        %v313 = vpack.c.b16 %v289, %v287
        %v314 = vpack.c.b16 %v290, %v288
        %v315 = vpack.c.b16 %v293, %v291
        %v316 = vpack.c.b16 %v294, %v292
        %v317 = vpack.c.b16 %v297, %v295
        %v318 = vpack.c.b16 %v298, %v296
        %v319 = vpack.c.b16 %v301, %v299
        %v320 = vpack.c.b16 %v302, %v300
        %v321 = vpack.c.b16 %v305, %v303
        %v322 = vpack.c.b16 %v306, %v304
        %339 = vmatprep.subr.bf16.mxu0 %v322
        %340 = vmatpush1.bf16.msra.mxu0 %v321
        %341 = vmatprep.subr.bf16.mxu0 %v320
        %342 = vmatpush1.bf16.msra.mxu0 %v319
        %343 = vmatprep.subr.bf16.mxu0 %v318
        %344 = vmatpush1.bf16.msra.mxu0 %v317
        %345 = vmatprep.subr.bf16.mxu0 %v316
        %346 = vmatpush1.bf16.msra.mxu0 %v315
        %347 = vmatprep.subr.bf16.mxu0 %v314
        %348 = vmatpush1.bf16.msra.mxu0 %v313
        %349 = vmatprep.subr.bf16.mxu0 %v312
        %350 = vmatpush1.bf16.msra.mxu0 %v311
        %351 = vmatprep.subr.bf16.mxu0 %v310
        %352 = vmatpush1.bf16.msra.mxu0 %v309
        %353 = vmatprep.subr.bf16.mxu0 %v308
        %354 = vmatpush1.bf16.msra.mxu0 %v307
        %355 = vmatprep.subr.bf16.mxu0 0
        %356 = vmatpush2.bf16.msra.mxu0 0
        %357 = vmatprep.subr.bf16.mxu0 0
        %358 = vmatpush2.bf16.msra.mxu0 0
        %359 = vmatprep.subr.bf16.mxu0 0
        %360 = vmatpush2.bf16.msra.mxu0 0
        %361 = vmatprep.subr.bf16.mxu0 0
        %362 = vmatpush2.bf16.msra.mxu0 0
        %363 = vmatprep.subr.bf16.mxu0 0
        %364 = vmatpush2.bf16.msra.mxu0 0
        %365 = vmatprep.subr.bf16.mxu0 0
        %366 = vmatpush2.bf16.msra.mxu0 0
        %367 = vmatprep.subr.bf16.mxu0 0
        %368 = vmatpush2.bf16.msra.mxu0 0
        %369 = vmatprep.subr.bf16.mxu0 0
        %370 = vmatpush2.bf16.msra.mxu0 0
        %371 = vmatprep.mubr.bf16.mxu0 0
        %372 = vmatmul.mubr.bf16.gmra.mxu0 %v255
        %v373 = vpop.f32.mrf.mxu0
        %v374 = vadd.f32 %v239, %v373
        %v375 = vpop.f32.mrf.mxu0
        %v376 = vadd.f32 %v240, %v375
        %v377 = vpop.f32.mrf.mxu0
        %v378 = vadd.f32 %v241, %v377
        %v379 = vpop.f32.mrf.mxu0
        %v380 = vadd.f32 %v242, %v379
        %381 = vmatprep.mubr.bf16.mxu0 0
        %382 = vmatmul.mubr.bf16.gmra.mxu0 %v256
        %v383 = vpop.f32.mrf.mxu0
        %v384 = vadd.f32 %v243, %v383
        %v385 = vpop.f32.mrf.mxu0
        %v386 = vadd.f32 %v244, %v385
        %v387 = vpop.f32.mrf.mxu0
        %v388 = vadd.f32 %v245, %v387
        %v389 = vpop.f32.mrf.mxu0
        %v390 = vadd.f32 %v246, %v389
        %391 = vdwg.mxu0
        %v392 = vpack.c.bf16 %v378, %v374
        %v393 = vpack.c.bf16 %v380, %v376
        %v394 = vpack.c.bf16 %v388, %v384
        %v395 = vpack.c.bf16 %v390, %v386
        %v400 = vunpack.c.l.b16 %v392
        %v401 = vunpack.c.l.b16 %v393
        %v402 = vunpack.c.h.b16 %v392
        %v403 = vunpack.c.h.b16 %v393
        %v404 = vunpack.c.l.b16 %v394
        %v405 = vunpack.c.l.b16 %v395
        %v406 = vunpack.c.h.b16 %v394
        %v407 = vunpack.c.h.b16 %v395
        %v408 = vpack.c.b16 %v401, %v400
        %v409 = vpack.c.b16 %v403, %v402
        %v410 = vpack.c.b16 %v405, %v404
        %v411 = vpack.c.b16 %v407, %v406
        %416 = vst [vmem:[%s217] sm:$0xff] %v408
        %417 = vst [vmem:[%s217 + $0x8] sm:$0xff] %v409
        %418 = vst [vmem:[%s217 + $0x10] sm:$0xff] %v410
        %419 = vst [vmem:[%s217 + $0x18] sm:$0xff] %v411
        %s420 = sand.u32 %s97, 1
        %s421 = scalar_lea.sflag [#allocation4], %s420
        %s422 = sand.u32 %s97, 1
        %s423 = smul.addr %s422, 32
        %s424 = scalar_lea.vmem [#allocation8], %s423
        // Predicated region
        $region45: #{tpu_custom_call.1} parent=31 // pred_check
          %p425 = pneg %p107
        $region46: #{tpu_custom_call.1} parent=31 // pred_check_branch
          %427 = sbr.rel (%p425) target = $region48
        $region47: #{tpu_custom_call.1} parent=31 // pred_region
          %s429 = ssub.s32 512, 512
          %430 = vsyncadd %s421, %s429
          %s431 = smul.addr %s21, 8
          %s432 = smul.addr %s431, 64
          %s433 = scalar_lea.hbm %s3, %s432
          %s434 = sshll.u32 %s424, 4
          %s435 = int_to_ptr.vmem [resolvable:$true] %s434
          %440 = dma.vmem_to_hbm [thread:$0]  %s435, 512, %s433, %s421, 128, 128, 8
        $region48: #{tpu_custom_call.1} parent=31 // pred_fallthru
          _
      $region32: #{tpu_custom_call.1} parent=5 // pred_fallthru
        _
      %p441 = scmp.le.s32.totalorder 2, %s16
      // Predicated region
      $region49: #{tpu_custom_call.1} parent=5 // pred_check
        %p442 = pneg %p441
      $region50: #{tpu_custom_call.1} parent=5 // pred_check_branch
        %444 = sbr.rel (%p442) target = $region52
      $region51: #{tpu_custom_call.1} parent=5 // pred_region
        %s445 = ssub.s32 %s16, 2
        // Predicated region
        $region53: #{tpu_custom_call.1} parent=51 // pred_check
          %p446 = pneg %p113
        $region54: #{tpu_custom_call.1} parent=51 // pred_check_branch
          %448 = sbr.rel (%p446) target = $region56
        $region55: #{tpu_custom_call.1} parent=51 // pred_region
          %s449 = sand.u32 %s98, 1
          %s450 = scalar_lea.sflag [#allocation4], %s449
          %s451 = sand.u32 %s98, 1
          %s452 = smul.addr %s451, 32
          %s453 = scalar_lea.vmem [#allocation8], %s452
          %454 = dma.done %s450, 512
        $region56: #{tpu_custom_call.1} parent=51 // pred_fallthru
          _
      $region52: #{tpu_custom_call.1} parent=5 // pred_fallthru
        _
    $region6: #{tpu_custom_call.1} parent=1 // loop_footer
      %s20 = sadd.s32 1, %s16
    $region7: #{tpu_custom_call.1} parent=1 // loop_footer_branch
      %15 = sbr.rel target = $region3
    $region8: #{tpu_custom_call.1} parent=1 // loop_exit
      _
    %455 = vsyncpa [#allocation3], 1
    %s456 = scalar_lea.sflag [#allocation3], 1
    %457 = vsyncpa %s456, 1
    %458 = vsyncpa [#allocation6], 1
    %459 = vsyncpa [#allocation4], 1
    %s460 = scalar_lea.sflag [#allocation4], 1
    %461 = vsyncpa %s460, 1

</llo_original>
